<compile_context>
chip_gen: v7x
topology: tpu7x:2x2x1
jax: 0.10.0
libtpu: 0.0.40
codegen_flags: <defaults>
</compile_context>

<pallas_src>
import functools

import jax
import jax.numpy as jnp
from jax import lax
from jax.experimental import pallas as pl
from jax.experimental.pallas import tpu as pltpu

LN_EPS = 1e-5


def _round_up(x, m):
    return (x + m - 1) // m * m


def _cdiv(a, b):
    return (a + b - 1) // b


def _vmem_capacity_bytes():
    try:
        return int(pltpu.get_tpu_info().vmem_capacity_bytes)
    except Exception:
        # Conservative fallback = v7x per-TC VMEM.
        return 64 * 1024 * 1024


def _pick_tb(B, granule, cap=128):
    """Batch tile: multiple of the output sublane granule, <= B, preferring
    >= 2 batch grid steps so v7x's two TensorCores both get work."""
    if B <= granule:
        return B  # single block equal to the full batch dim (always legal)
    half = _round_up(_cdiv(B, 2), granule)
    tb = min(half, cap, (B // granule) * granule)
    return max(granule, tb)


def _pick_tn(N, granule, limit):
    """Seq tile: full N when it fits; otherwise balance the tiles so the tail
    waste stays small without exploding the grid-step count."""
    if N <= limit:
        return N  # single step, equals the full array dim (always legal)
    steps = _cdiv(N, limit)
    return min(limit, _round_up(_cdiv(N, steps), granule))


def _pick_tiles(B, N, D, C_pad, x_it, w_it, b_it, o_it):
    """Pick (TB, TN, vmem_limit_bytes) against the VMEM budget."""
    cap = _vmem_capacity_bytes()
    # ~24-32 MiB absolute headroom on 128 MiB parts (v5e/v6e), 16 MiB on v7x.
    headroom = 32 * 1024 * 1024 if cap >= 96 * 1024 * 1024 else 16 * 1024 * 1024
    budget = cap - headroom

    granule_n = max(8, 32 // x_it)   # sublane packing granule of x
    granule_b = max(8, 32 // o_it)   # sublane packing granule of the output

    TB = _pick_tb(B, granule_b)

    # Resident / non-x bytes (params still double-buffered by the pipeline).
    resident = (
        2 * D * C_pad * w_it        # classifier weight
        + 2 * C_pad * b_it          # classifier bias
        + 4 * D * 4                 # gamma + beta
        + 2 * TB * C_pad * o_it     # output block
        + TB * D * 4                # f32 accumulator scratch
    )

    # Per-token VMEM cost: double-buffered x slice + ~3 live f32 temporaries
    # (xf / centered / xn) that Mosaic will keep around in the tile body.
    per_token = TB * D * (2 * x_it + 12)
    max_tn = max(granule_n, (budget - resident) // per_token)
    limit = max(granule_n, min(1024, (max_tn // granule_n) * granule_n))

    TN = _pick_tn(N, granule_n, limit)
    return TB, TN, int(cap)


def _cls_head_kernel(x_ref, gamma_ref, beta_ref, w_ref, b_ref, o_ref, acc_ref,
                     *, n_tokens, d_dim, tile_n, needs_mask):
    ni = pl.program_id(1)

    @pl.when(ni == 0)
    def _init():
        acc_ref[...] = jnp.zeros_like(acc_ref)

    # x tile stays in native dtype in VMEM; upcast inside the expression.
    xf = x_ref[...].astype(jnp.float32)                    # (TB, TN, D)

    if needs_mask:
        # Zero out the tokens of the tail tile that lie past the true N, so
        # they contribute exactly zero to the accumulator (and never inject
        # garbage/NaN into valid rows).
        tok = lax.broadcasted_iota(jnp.int32, (1, tile_n, 1), 1) + ni * tile_n
        xf = jnp.where(tok < n_tokens, xf, 0.0)

    # Two-pass moments over the lane (embed) axis, all stats in f32.
    inv_d = jnp.float32(1.0 / d_dim)
    mean = jnp.sum(xf, axis=-1, keepdims=True) * inv_d     # (TB, TN, 1)
    centered = xf - mean
    var = jnp.sum(centered * centered, axis=-1, keepdims=True) * inv_d
    xn = centered * lax.rsqrt(var + jnp.float32(LN_EPS))   # (TB, TN, D)

    # Accumulate the sum over the sequence axis in f32 (gamma/beta affine is
    # applied once at finalize — it commutes with the mean over N).
    acc_ref[...] += jnp.sum(xn, axis=1)                    # (TB, D)

    @pl.when(ni == pl.num_programs(1) - 1)
    def _finalize():
        gamma = gamma_ref[...].astype(jnp.float32)         # (1, D)
        beta = beta_ref[...].astype(jnp.float32)           # (1, D)
        pooled = gamma * (acc_ref[...] * jnp.float32(1.0 / n_tokens)) + beta
        w = w_ref[...].astype(jnp.float32)                 # (D, C_pad)
        bias = b_ref[...].astype(jnp.float32)              # (1, C_pad)
        out = jnp.dot(pooled, w, preferred_element_type=jnp.float32) + bias
        o_ref[...] = out.astype(o_ref.dtype)


def classification_head(x, gamma, beta, w, b):
    """x: (B, N, D); gamma/beta: (1, D); w: (D, C); b: (1, C) -> (B, C)."""
    B, N, D = x.shape
    C = w.shape[1]

    # Only the tiny classifier params get padded (lane-dense output stores);
    # x itself is never copied/padded.
    C_pad = _round_up(C, 128)

    x_it = jnp.dtype(x.dtype).itemsize
    w_it = jnp.dtype(w.dtype).itemsize
    b_it = jnp.dtype(b.dtype).itemsize
    o_it = jnp.dtype(x.dtype).itemsize
    TB, TN, vmem_limit = _pick_tiles(B, N, D, C_pad, x_it, w_it, b_it, o_it)

    if C_pad != C:
        w_p = jnp.pad(w, ((0, D and 0), (0, C_pad - C)))
        b_p = jnp.pad(b, ((0, 0), (0, C_pad - C)))
    else:
        w_p, b_p = w, b

    grid = (_cdiv(B, TB), _cdiv(N, TN))
    needs_mask = (N % TN) != 0

    kernel = functools.partial(
        _cls_head_kernel,
        n_tokens=N, d_dim=D, tile_n=TN, needs_mask=needs_mask)

    out_p = pl.pallas_call(
        kernel,
        out_shape=jax.ShapeDtypeStruct((B, C_pad), x.dtype),
        grid_spec=pltpu.PrefetchScalarGridSpec(
            num_scalar_prefetch=0,
            grid=grid,
            in_specs=[
                pl.BlockSpec((TB, TN, D), lambda bi, ni: (bi, ni, 0)),  # x
                pl.BlockSpec((1, D), lambda bi, ni: (0, 0)),            # gamma
                pl.BlockSpec((1, D), lambda bi, ni: (0, 0)),            # beta
                pl.BlockSpec((D, C_pad), lambda bi, ni: (0, 0)),        # W
                pl.BlockSpec((1, C_pad), lambda bi, ni: (0, 0)),        # bias
            ],
            out_specs=pl.BlockSpec((TB, C_pad), lambda bi, ni: (bi, 0)),
            scratch_shapes=[pltpu.VMEM((TB, D), jnp.float32)],
        ),
        compiler_params=pltpu.CompilerParams(
            dimension_semantics=("parallel", "arbitrary"),
            vmem_limit_bytes=vmem_limit,
        ),
    )(x, gamma, beta, w_p, b_p)

    return out_p[:, :C] if C_pad != C else out_p


def reference(x, gamma, beta, w, b):
    x32 = x.astype(jnp.float32)
    mean = jnp.mean(x32, axis=-1, keepdims=True)
    var = jnp.mean((x32 - mean) ** 2, axis=-1, keepdims=True)
    xn = (x32 - mean) * lax.rsqrt(var + LN_EPS)
    xn = xn * gamma[None, :, :] + beta[None, :, :]
    pooled = jnp.mean(xn, axis=1)
    return pooled @ w + b


if __name__ == "__main__":
    B, N, D, C = 2, 8, 32, 10

    key = jax.random.PRNGKey(0)
    kx, kw, kb = jax.random.split(key, 3)

    x = jax.random.normal(kx, (B, N, D), dtype=jnp.float32)

    # Deterministic parameter init (matches nn.LayerNorm / nn.Linear shapes).
    gamma = jnp.ones((1, D), dtype=jnp.float32)    # LayerNorm weight
    beta = jnp.zeros((1, D), dtype=jnp.float32)    # LayerNorm bias
    bound = 1.0 / (D ** 0.5)
    w = jax.random.uniform(kw, (D, C), minval=-bound, maxval=bound, dtype=jnp.float32)
    b = jax.random.uniform(kb, (1, C), minval=-bound, maxval=bound, dtype=jnp.float32)

    out = jax.block_until_ready(classification_head(x, gamma, beta, w, b))
    ref = jax.block_until_ready(reference(x, gamma, beta, w, b))

    assert out.shape == (B, C)
    assert jnp.allclose(out, ref, atol=1e-4, rtol=1e-4), "mismatch vs pure-JAX reference"

    print("KERNEL_OK")
</pallas_src>

<mosaic_0001>
module attributes {stable_mosaic.version = 11 : i64} {
  func.func @_cls_head_kernel(%arg0: i32, %arg1: i32, %arg2: memref<2x8x32xf32, #tpu.memory_space<vmem>>, %arg3: memref<1x32xf32, #tpu.memory_space<vmem>>, %arg4: memref<1x32xf32, #tpu.memory_space<vmem>>, %arg5: memref<32x128xf32, #tpu.memory_space<vmem>>, %arg6: memref<1x128xf32, #tpu.memory_space<vmem>>, %arg7: memref<2x128xf32, #tpu.memory_space<vmem>>, %arg8: memref<2x32xf32, #tpu.memory_space<vmem>>) attributes {dimension_semantics = [#tpu.dimension_semantics<parallel>, #tpu.dimension_semantics<arbitrary>], iteration_bounds = array<i64: 1, 1>, scalar_prefetch = 0 : i64, scratch_operands = 1 : i64, tpu.core_type = #tpu.core_type<tc>, window_params = [{transform_indices = @transform_0, window_bounds = array<i64: 2, 8, 32>}, {pipeline_mode = #tpu.pipeline_mode<synchronous>, transform_indices = @transform_1, window_bounds = array<i64: 1, 32>}, {pipeline_mode = #tpu.pipeline_mode<synchronous>, transform_indices = @transform_2, window_bounds = array<i64: 1, 32>}, {pipeline_mode = #tpu.pipeline_mode<synchronous>, transform_indices = @transform_3, window_bounds = array<i64: 32, 128>}, {pipeline_mode = #tpu.pipeline_mode<synchronous>, transform_indices = @transform_4, window_bounds = array<i64: 1, 128>}, {transform_indices = @transform_5, window_bounds = array<i64: 2, 128>}]} {
    %c0_i32 = arith.constant 0 : i32
    %0 = arith.cmpi eq, %arg1, %c0_i32 : i32
    %1 = arith.extui %0 : i1 to i32
    %c0_i32_0 = arith.constant 0 : i32
    %2 = arith.cmpi ne, %1, %c0_i32_0 : i32
    scf.if %2 {
      %cst_14 = arith.constant 0.000000e+00 : f32
      %27 = vector.broadcast %cst_14 : f32 to vector<2x32xf32>
      %c0_15 = arith.constant 0 : index
      %c0_16 = arith.constant 0 : index
      %28 = vector.load %arg8[%c0_15, %c0_16] : memref<2x32xf32, #tpu.memory_space<vmem>>, vector<2x32xf32>
      tpu.vector_store %arg8[%c0_15, %c0_16], %27 {strides = array<i32>} : memref<2x32xf32, #tpu.memory_space<vmem>>, vector<2x32xf32>,
    } else {
    }
    %c0 = arith.constant 0 : index
    %c0_1 = arith.constant 0 : index
    %c0_2 = arith.constant 0 : index
    %3 = vector.load %arg2[%c0, %c0_1, %c0_2] : memref<2x8x32xf32, #tpu.memory_space<vmem>>, vector<2x8x32xf32>
    %cst = arith.constant dense<0.000000e+00> : vector<2x8xf32>
    %4 = vector.multi_reduction <add>, %3, %cst [2] : vector<2x8x32xf32> to vector<2x8xf32>
    %5 = vector.shape_cast %4 : vector<2x8xf32> to vector<2x8x1xf32>
    %cst_3 = arith.constant 3.125000e-02 : f32
    %6 = vector.broadcast %cst_3 : f32 to vector<2x8x1xf32>
    %7 = arith.mulf %5, %6 : vector<2x8x1xf32>
    %8 = vector.broadcast %7 : vector<2x8x1xf32> to vector<2x8x32xf32>
    %9 = arith.subf %3, %8 : vector<2x8x32xf32>
    %10 = arith.mulf %9, %9 : vector<2x8x32xf32>
    %cst_4 = arith.constant dense<0.000000e+00> : vector<2x8xf32>
    %11 = vector.multi_reduction <add>, %10, %cst_4 [2] : vector<2x8x32xf32> to vector<2x8xf32>
    %12 = vector.shape_cast %11 : vector<2x8xf32> to vector<2x8x1xf32>
    %cst_5 = arith.constant 3.125000e-02 : f32
    %13 = vector.broadcast %cst_5 : f32 to vector<2x8x1xf32>
    %14 = arith.mulf %12, %13 : vector<2x8x1xf32>
    %cst_6 = arith.constant 9.99999974E-6 : f32
    %15 = vector.broadcast %cst_6 : f32 to vector<2x8x1xf32>
    %16 = arith.addf %14, %15 : vector<2x8x1xf32>
    %17 = math.rsqrt %16 : vector<2x8x1xf32>
    %18 = vector.broadcast %17 : vector<2x8x1xf32> to vector<2x8x32xf32>
    %19 = arith.mulf %9, %18 : vector<2x8x32xf32>
    %c0_7 = arith.constant 0 : index
    %c0_8 = arith.constant 0 : index
    %20 = vector.load %arg8[%c0_7, %c0_8] : memref<2x32xf32, #tpu.memory_space<vmem>>, vector<2x32xf32>
    %cst_9 = arith.constant dense<0.000000e+00> : vector<2x32xf32>
    %21 = vector.multi_reduction <add>, %19, %cst_9 [1] : vector<2x8x32xf32> to vector<2x32xf32>
    %22 = arith.addf %20, %21 : vector<2x32xf32>
    %c0_10 = arith.constant 0 : index
    %c0_11 = arith.constant 0 : index
    %23 = vector.load %arg8[%c0_10, %c0_11] : memref<2x32xf32, #tpu.memory_space<vmem>>, vector<2x32xf32>
    tpu.vector_store %arg8[%c0_10, %c0_11], %22 {strides = array<i32>} : memref<2x32xf32, #tpu.memory_space<vmem>>, vector<2x32xf32>,
    %c0_i32_12 = arith.constant 0 : i32
    %24 = arith.cmpi eq, %arg1, %c0_i32_12 : i32
    %25 = arith.extui %24 : i1 to i32
    %c0_i32_13 = arith.constant 0 : i32
    %26 = arith.cmpi ne, %25, %c0_i32_13 : i32
    scf.if %26 {
      %c0_14 = arith.constant 0 : index
      %c0_15 = arith.constant 0 : index
      %27 = vector.load %arg3[%c0_14, %c0_15] : memref<1x32xf32, #tpu.memory_space<vmem>>, vector<1x32xf32>
      %c0_16 = arith.constant 0 : index
      %c0_17 = arith.constant 0 : index
      %28 = vector.load %arg4[%c0_16, %c0_17] : memref<1x32xf32, #tpu.memory_space<vmem>>, vector<1x32xf32>
      %c0_18 = arith.constant 0 : index
      %c0_19 = arith.constant 0 : index
      %29 = vector.load %arg8[%c0_18, %c0_19] : memref<2x32xf32, #tpu.memory_space<vmem>>, vector<2x32xf32>
      %cst_20 = arith.constant 1.250000e-01 : f32
      %30 = vector.broadcast %cst_20 : f32 to vector<2x32xf32>
      %31 = arith.mulf %29, %30 : vector<2x32xf32>
      %32 = vector.broadcast %27 : vector<1x32xf32> to vector<2x32xf32>
      %33 = arith.mulf %32, %31 : vector<2x32xf32>
      %34 = vector.broadcast %28 : vector<1x32xf32> to vector<2x32xf32>
      %35 = arith.addf %33, %34 : vector<2x32xf32>
      %c0_21 = arith.constant 0 : index
      %c0_22 = arith.constant 0 : index
      %36 = vector.load %arg5[%c0_21, %c0_22] : memref<32x128xf32, #tpu.memory_space<vmem>>, vector<32x128xf32>
      %c0_23 = arith.constant 0 : index
      %c0_24 = arith.constant 0 : index
      %37 = vector.load %arg6[%c0_23, %c0_24] : memref<1x128xf32, #tpu.memory_space<vmem>>, vector<1x128xf32>
      %cst_25 = arith.constant dense<0.000000e+00> : vector<2x128xf32>
      %38 = tpu.matmul %35, %36, %cst_25 {dimension_numbers = #tpu.dot_dimension_numbers<[1], [0], [0], [1], [0, 0, 1, 1], [], []>} : vector<2x32xf32>, vector<32x128xf32>, vector<2x128xf32> -> vector<2x128xf32>
      %39 = vector.broadcast %37 : vector<1x128xf32> to vector<2x128xf32>
      %40 = arith.addf %38, %39 : vector<2x128xf32>
      %c0_26 = arith.constant 0 : index
      %c0_27 = arith.constant 0 : index
      %41 = vector.load %arg7[%c0_26, %c0_27] : memref<2x128xf32, #tpu.memory_space<vmem>>, vector<2x128xf32>
      tpu.vector_store %arg7[%c0_26, %c0_27], %40 {strides = array<i32>} : memref<2x128xf32, #tpu.memory_space<vmem>>, vector<2x128xf32>,
    } else {
    }
    return
  }
  func.func @transform_0(%arg0: i32, %arg1: i32) -> (i32, i32, i32) {
    %c0_i32 = arith.constant 0 : i32
    %c0_i32_0 = arith.constant 0 : i32
    return %arg0, %arg1, %c0_i32 : i32, i32, i32
  }
  func.func @transform_1(%arg0: i32, %arg1: i32) -> (i32, i32) {
    %c0_i32 = arith.constant 0 : i32
    %c0_i32_0 = arith.constant 0 : i32
    %c0_i32_1 = arith.constant 0 : i32
    return %c0_i32, %c0_i32_0 : i32, i32
  }
  func.func @transform_2(%arg0: i32, %arg1: i32) -> (i32, i32) {
    %c0_i32 = arith.constant 0 : i32
    %c0_i32_0 = arith.constant 0 : i32
    %c0_i32_1 = arith.constant 0 : i32
    return %c0_i32, %c0_i32_0 : i32, i32
  }
  func.func @transform_3(%arg0: i32, %arg1: i32) -> (i32, i32) {
    %c0_i32 = arith.constant 0 : i32
    %c0_i32_0 = arith.constant 0 : i32
    %c0_i32_1 = arith.constant 0 : i32
    return %c0_i32, %c0_i32_0 : i32, i32
  }
  func.func @transform_4(%arg0: i32, %arg1: i32) -> (i32, i32) {
    %c0_i32 = arith.constant 0 : i32
    %c0_i32_0 = arith.constant 0 : i32
    %c0_i32_1 = arith.constant 0 : i32
    return %c0_i32, %c0_i32_0 : i32, i32
  }
  func.func @transform_5(%arg0: i32, %arg1: i32) -> (i32, i32) {
    %c0_i32 = arith.constant 0 : i32
    %c0_i32_0 = arith.constant 0 : i32
    return %arg0, %c0_i32 : i32, i32
  }
}

</mosaic_0001>

<llo_original>
// kernel: tpu_custom_call.1
$region0: #{tpu_custom_call.1}
  #allocation0 [shape = 'u32[]', space=smem, size = 0x4, offset = 0x4, fixed_abs, tag = 'smem constant byte address 0x4 - core index']
  #allocation1 [shape = 'u32[144,128]{1,0:T(1,128)}', space=vmem, size = 0x12000, scoped, tag = 'internal scratch']
  #allocation2 [shape = 'f32[2,32]{1,0:T(2,128)}', space=vmem, size = 0x400, scoped, tag = 'scratch operand']
  %s0 = inlined_call_operand.hbm [shape: f32[2,8,32], index: 0, kind: input, shape index: {}]
  %s1 = inlined_call_operand.hbm [shape: f32[1,32], index: 1, kind: input, shape index: {}]
  %s2 = inlined_call_operand.hbm [shape: f32[1,32], index: 2, kind: input, shape index: {}]
  %s3 = inlined_call_operand.hbm [shape: f32[32,128], index: 3, kind: input, shape index: {}]
  %s4 = inlined_call_operand.hbm [shape: f32[1,128], index: 4, kind: input, shape index: {}]
  %s5 = inlined_call_operand.hbm [shape: f32[2,128], index: 5, kind: output, shape index: {}]
  %s6 = sld [smem:[#allocation0]]
  $region58: #{tpu_custom_call.1} parent=0
    _
  %s8 = ssub.s32 1, %s6
  %s9 = scalar_select 0, %s8, %s6
  $region1: #{tpu_custom_call.1} parent=0
    #allocation3 [shape = 'u8[8192]{0}', space=vmem, size = 0x2000, scoped, tag = 'input window, operand 0, single buffered']
    #allocation4 [shape = 's32[1]{0}', space=sflag, size = 0x4, scoped, tag = 'scoped memory for tpu_custom_call.1']
    #allocation5 [shape = 's32[1]{0}', space=sflag, size = 0x4, scoped, tag = 'scoped memory for tpu_custom_call.1']
    #allocation6 [shape = 'u8[512]{0}', space=vmem, size = 0x400, scoped, tag = 'input window, operand 1, single buffered']
    #allocation7 [shape = 's32[1]{0}', space=sflag, size = 0x4, scoped, tag = 'scoped memory for tpu_custom_call.1']
    #allocation8 [shape = 'u8[512]{0}', space=vmem, size = 0x400, scoped, tag = 'input window, operand 2, single buffered']
    #allocation9 [shape = 'u8[16384]{0}', space=vmem, size = 0x4000, scoped, tag = 'input window, operand 3, single buffered']
    #allocation10 [shape = 's32[1]{0}', space=sflag, size = 0x4, scoped, tag = 'scoped memory for tpu_custom_call.1']
    #allocation11 [shape = 'u8[512]{0}', space=vmem, size = 0x400, scoped, tag = 'input window, operand 4, single buffered']
    #allocation12 [shape = 'u8[1024]{0}', space=vmem, size = 0x400, scoped, tag = 'output window, operand 0, single buffered']
    %10 = vsyncpa [#allocation4], 0
    %11 = vsyncpa [#allocation7], 0
    %12 = vsyncpa [#allocation10], 0
    %13 = vsyncpa [#allocation5], 0
    // Predicated region
    $region2: #{tpu_custom_call.1} parent=1 // pred_check
      _
    $region3: #{tpu_custom_call.1} parent=1 // pred_check_branch
      %15 = sbr.rel (0) target = $region5
    $region4: #{tpu_custom_call.1} parent=1 // pred_region
      %s17 = ssub.s32 256, 256
      %18 = vsyncadd [#allocation4], %s17
      %s19 = sshll.u32 [#allocation3], 4
      %s20 = int_to_ptr.vmem [resolvable:$true] %s19
      %25 = dma.hbm_to_vmem [thread:$0]  %s0, 256, %s20, [#allocation4], 128, 128, 8
    $region5: #{tpu_custom_call.1} parent=1 // pred_fallthru
      _
    // Predicated region
    $region6: #{tpu_custom_call.1} parent=1 // pred_check
      _
    $region7: #{tpu_custom_call.1} parent=1 // pred_check_branch
      %27 = sbr.rel (0) target = $region9
    $region8: #{tpu_custom_call.1} parent=1 // pred_region
      %s29 = ssub.s32 16, 16
      %30 = vsyncadd [#allocation7], %s29
      %s32 = sshll.u32 [#allocation6], 4
      %s33 = int_to_ptr.vmem [resolvable:$true] %s32
      %35 = dma.hbm_to_vmem [thread:$0]  %s1, 16, %s33, [#allocation7]
    $region9: #{tpu_custom_call.1} parent=1 // pred_fallthru
      _
    // Predicated region
    $region10: #{tpu_custom_call.1} parent=1 // pred_check
      _
    $region11: #{tpu_custom_call.1} parent=1 // pred_check_branch
      %37 = sbr.rel (0) target = $region13
    $region12: #{tpu_custom_call.1} parent=1 // pred_region
      %s39 = ssub.s32 16, 16
      %40 = vsyncadd [#allocation7], %s39
      %s42 = sshll.u32 [#allocation8], 4
      %s43 = int_to_ptr.vmem [resolvable:$true] %s42
      %45 = dma.hbm_to_vmem [thread:$0]  %s2, 16, %s43, [#allocation7]
    $region13: #{tpu_custom_call.1} parent=1 // pred_fallthru
      _
    // Predicated region
    $region14: #{tpu_custom_call.1} parent=1 // pred_check
      _
    $region15: #{tpu_custom_call.1} parent=1 // pred_check_branch
      %47 = sbr.rel (0) target = $region17
    $region16: #{tpu_custom_call.1} parent=1 // pred_region
      %s49 = ssub.s32 512, 512
      %50 = vsyncadd [#allocation10], %s49
      %s51 = sshll.u32 [#allocation9], 4
      %s52 = int_to_ptr.vmem [resolvable:$true] %s51
      %57 = dma.hbm_to_vmem [thread:$0]  %s3, 512, %s52, [#allocation10], 128, 128, 8
    $region17: #{tpu_custom_call.1} parent=1 // pred_fallthru
      _
    // Predicated region
    $region18: #{tpu_custom_call.1} parent=1 // pred_check
      _
    $region19: #{tpu_custom_call.1} parent=1 // pred_check_branch
      %59 = sbr.rel (0) target = $region21
    $region20: #{tpu_custom_call.1} parent=1 // pred_region
      %s61 = ssub.s32 16, 16
      %62 = vsyncadd [#allocation10], %s61
      %s64 = sshll.u32 [#allocation11], 4
      %s65 = int_to_ptr.vmem [resolvable:$true] %s64
      %67 = dma.hbm_to_vmem [thread:$0]  %s4, 16, %s65, [#allocation10]
    $region21: #{tpu_custom_call.1} parent=1 // pred_fallthru
      _
    // Predicated region
    $region22: #{tpu_custom_call.1} parent=1 // pred_check
      _
    $region23: #{tpu_custom_call.1} parent=1 // pred_check_branch
      %69 = sbr.rel (0) target = $region25
    $region24: #{tpu_custom_call.1} parent=1 // pred_region
      %70 = dma.done [#allocation4], 256
    $region25: #{tpu_custom_call.1} parent=1 // pred_fallthru
      _
    // Predicated region
    $region26: #{tpu_custom_call.1} parent=1 // pred_check
      _
    $region27: #{tpu_custom_call.1} parent=1 // pred_check_branch
      %72 = sbr.rel (0) target = $region29
    $region28: #{tpu_custom_call.1} parent=1 // pred_region
      %73 = dma.done [#allocation7], 16
    $region29: #{tpu_custom_call.1} parent=1 // pred_fallthru
      _
    // Predicated region
    $region30: #{tpu_custom_call.1} parent=1 // pred_check
      _
    $region31: #{tpu_custom_call.1} parent=1 // pred_check_branch
      %75 = sbr.rel (0) target = $region33
    $region32: #{tpu_custom_call.1} parent=1 // pred_region
      %76 = dma.done [#allocation7], 16
    $region33: #{tpu_custom_call.1} parent=1 // pred_fallthru
      _
    // Predicated region
    $region34: #{tpu_custom_call.1} parent=1 // pred_check
      _
    $region35: #{tpu_custom_call.1} parent=1 // pred_check_branch
      %78 = sbr.rel (0) target = $region37
    $region36: #{tpu_custom_call.1} parent=1 // pred_region
      %79 = dma.done [#allocation10], 512
    $region37: #{tpu_custom_call.1} parent=1 // pred_fallthru
      _
    // Predicated region
    $region38: #{tpu_custom_call.1} parent=1 // pred_check
      _
    $region39: #{tpu_custom_call.1} parent=1 // pred_check_branch
      %81 = sbr.rel (0) target = $region41
    $region40: #{tpu_custom_call.1} parent=1 // pred_region
      %82 = dma.done [#allocation10], 16
    $region41: #{tpu_custom_call.1} parent=1 // pred_fallthru
      _
    %p83 = scmp.eq.s32.totalorder 0, 0
    // Predicated region
    $region42: #{tpu_custom_call.1} parent=1 // pred_check
      %p84 = pneg %p83
    $region43: #{tpu_custom_call.1} parent=1 // pred_check_branch
      %86 = sbr.rel (%p84) target = $region45
    $region44: #{tpu_custom_call.1} parent=1 // pred_region
      %vm87 = vcmask 254976
      %88 = vst.msk [vmem:[#allocation2] sm:$0x3] %vm87, 0.0
    $region45: #{tpu_custom_call.1} parent=1 // pred_fallthru
      _
    %v89 = vld [vmem:[#allocation3] sm:$0xff]
    %v90 = vld [vmem:[#allocation3 + $0x8] sm:$0xff]
    %vm91 = vcmask 261120
    %v92 = vsel %vm91, %v89, 0.0
    %93 = vadd.xlane.f32.xlu0 %v92
    %v94 = vpop.xlane.xlu0 %93
    %v95 = vsel %vm91, %v90, 0.0
    %96 = vadd.xlane.f32.xlu0 %v95
    %v97 = vpop.xlane.xlu0 %96
    %v98 = vmul.f32 %v94, 0.03125
    %v99 = vmul.f32 %v97, 0.03125
    %v100 = vsub.f32 %v89, %v98
    %v101 = vsub.f32 %v90, %v99
    %v102 = vmul.f32 %v100, %v100
    %v103 = vmul.f32 %v101, %v101
    %v104 = vsel %vm91, %v102, 0.0
    %105 = vadd.xlane.f32.xlu0 %v104
    %v106 = vpop.xlane.xlu0 %105
    %v107 = vsel %vm91, %v103, 0.0
    %108 = vadd.xlane.f32.xlu0 %v107
    %v109 = vpop.xlane.xlu0 %108
    %v110 = vmul.f32 %v106, 0.03125
    %v111 = vmul.f32 %v109, 0.03125
    %v112 = vadd.f32 %v110, 1e-05
    %v113 = vadd.f32 %v111, 1e-05
    %v114 = vrsqrt.pop %v112
    %v115 = vrsqrt.pop %v113
    %v116 = vmul.f32 %v100, %v114
    %v117 = vmul.f32 %v101, %v115
    %v118 = vld [vmem:[#allocation2] sm:$0x3]
    %v119 = vsel %vm91, %v116, 0.0
    %v120 = vrot.slane %v119, 4
    %v121 = vadd.f32 %v119, %v120
    %v122 = vrot.slane %v121, 2
    %v123 = vadd.f32 %v121, %v122
    %v124 = vrot.slane %v123, 1
    %v125 = vadd.f32 %v123, %v124
    %v126 = vsel %vm91, %v117, 0.0
    %v127 = vrot.slane %v126, 4
    %v128 = vadd.f32 %v126, %v127
    %v129 = vrot.slane %v128, 2
    %v130 = vadd.f32 %v128, %v129
    %v131 = vrot.slane %v130, 1
    %v132 = vadd.f32 %v130, %v131
    %vm135 = vcmask 1041409
    %v136 = vsel %vm135, %v132, %v125
    %v138 = vadd.f32 %v118, %v136
    %vm139 = vcmask 254976
    %140 = vst.msk [vmem:[#allocation2] sm:$0x3] %vm139, %v138
    // Predicated region
    $region46: #{tpu_custom_call.1} parent=1 // pred_check
      %p141 = pneg %p83
    $region47: #{tpu_custom_call.1} parent=1 // pred_check_branch
      %143 = sbr.rel (%p141) target = $region49
    $region48: #{tpu_custom_call.1} parent=1 // pred_region
      %v144 = vld [vmem:[#allocation6] sm:$0x1]
      %v145 = vld [vmem:[#allocation8] sm:$0x1]
      %v146 = vld [vmem:[#allocation2] sm:$0x3]
      %v147 = vmul.f32 %v146, 0.125
      %v149 = vlaneseq
      %v150 = vshrl.u32 %v149, 7
      %v151 = vsub.s32 0, %v150
      %v152 = vrot.slane %v144, %v151
      %v154 = vmul.f32 %v152, %v147
      %v156 = vlaneseq
      %v157 = vshrl.u32 %v156, 7
      %v158 = vsub.s32 0, %v157
      %v159 = vrot.slane %v145, %v158
      %v161 = vadd.f32 %v154, %v159
      %v162 = vld [vmem:[#allocation9] sm:$0xff]
      %v163 = vld [vmem:[#allocation9 + $0x8] sm:$0xff]
      %v164 = vld [vmem:[#allocation9 + $0x10] sm:$0xff]
      %v165 = vld [vmem:[#allocation9 + $0x18] sm:$0xff]
      %v166 = vld [vmem:[#allocation11] sm:$0x1]
      %v168 = vlaneseq
      %v169 = vshrl.u32 %v168, 7
      %v170 = vsub.s32 0, %v169
      %v171 = vrot.slane %v166, %v170
      %v174 = vsel %vm91, %v161, 0
      %176 = vmatprep.subr.mxu0 0.0
      %177 = vmatpush1.msra.mxu0 %v162
      %178 = vmatprep.subr.mxu0 0.0
      %179 = vmatpush1.msra.mxu0 %v163
      %180 = vmatprep.subr.mxu0 0.0
      %181 = vmatpush1.msra.mxu0 %v164
      %182 = vmatprep.subr.mxu0 0.0
      %183 = vmatpush1.msra.mxu0 %v165
      %184 = vmatprep.subr.mxu0 0.0
      %185 = vmatpush1.msra.mxu0 0.0
      %186 = vmatprep.subr.mxu0 0.0
      %187 = vmatpush1.msra.mxu0 0.0
      %188 = vmatprep.subr.mxu0 0.0
      %189 = vmatpush1.msra.mxu0 0.0
      %190 = vmatprep.subr.mxu0 0.0
      %191 = vmatpush1.msra.mxu0 0.0
      %192 = vmatprep.subr.mxu0 0.0
      %193 = vmatpush1.msra.mxu0 0.0
      %194 = vmatprep.subr.mxu0 0.0
      %195 = vmatpush1.msra.mxu0 0.0
      %196 = vmatprep.subr.mxu0 0.0
      %197 = vmatpush1.msra.mxu0 0.0
      %198 = vmatprep.subr.mxu0 0.0
      %199 = vmatpush1.msra.mxu0 0.0
      %200 = vmatprep.subr.mxu0 0.0
      %201 = vmatpush1.msra.mxu0 0.0
      %202 = vmatprep.subr.mxu0 0.0
      %203 = vmatpush1.msra.mxu0 0.0
      %204 = vmatprep.subr.mxu0 0.0
      %205 = vmatpush1.msra.mxu0 0.0
      %206 = vmatprep.subr.mxu0 0.0
      %207 = vmatpush1.msra.mxu0 0.0
      %208 = vmatprep.subr.mxu0 0.0
      %209 = vmatpush1.msra.mxu0 0.0
      %210 = vmatprep.subr.mxu0 0.0
      %211 = vmatpush1.msra.mxu0 0.0
      %212 = vmatprep.subr.mxu0 0.0
      %213 = vmatpush1.msra.mxu0 0.0
      %214 = vmatprep.subr.mxu0 0.0
      %215 = vmatpush1.msra.mxu0 0.0
      %216 = vmatprep.subr.mxu0 0.0
      %217 = vmatpush1.msra.mxu0 0.0
      %218 = vmatprep.subr.mxu0 0.0
      %219 = vmatpush1.msra.mxu0 0.0
      %220 = vmatprep.subr.mxu0 0.0
      %221 = vmatpush1.msra.mxu0 0.0
      %222 = vmatprep.subr.mxu0 0.0
      %223 = vmatpush1.msra.mxu0 0.0
      %224 = vmatprep.subr.mxu0 0.0
      %225 = vmatpush1.msra.mxu0 0.0
      %226 = vmatprep.subr.mxu0 0.0
      %227 = vmatpush1.msra.mxu0 0.0
      %228 = vmatprep.subr.mxu0 0.0
      %229 = vmatpush1.msra.mxu0 0.0
      %230 = vmatprep.subr.mxu0 0.0
      %231 = vmatpush1.msra.mxu0 0.0
      %232 = vmatprep.subr.mxu0 0.0
      %233 = vmatpush1.msra.mxu0 0.0
      %234 = vmatprep.subr.mxu0 0.0
      %235 = vmatpush1.msra.mxu0 0.0
      %236 = vmatprep.subr.mxu0 0.0
      %237 = vmatpush1.msra.mxu0 0.0
      %238 = vmatprep.subr.mxu0 0.0
      %239 = vmatpush1.msra.mxu0 0.0
      %240 = vmatprep.mubr.f32.mxu0 0.0
      %241 = vmatmul.mubr.f32.gmra.mrb[0].mxu0 %v174
      %v242 = vpop.f32.mrb[0].mxu0
      %v243 = vadd.f32 %v171, %v242
      %v244 = vpop.f32.mrb[0].mxu0
      %245 = vdwg.mxu0
      %246 = vst [vmem:[#allocation12] sm:$0x3] %v243
    $region49: #{tpu_custom_call.1} parent=1 // pred_fallthru
      _
    // Predicated region
    $region50: #{tpu_custom_call.1} parent=1 // pred_check
      _
    $region51: #{tpu_custom_call.1} parent=1 // pred_check_branch
      %248 = sbr.rel (0) target = $region53
    $region52: #{tpu_custom_call.1} parent=1 // pred_region
      %s250 = ssub.s32 32, 32
      %251 = vsyncadd [#allocation5], %s250
      %s253 = sshll.u32 [#allocation12], 4
      %s254 = int_to_ptr.vmem [resolvable:$true] %s253
      %256 = dma.vmem_to_hbm [thread:$0]  %s254, 32, %s5, [#allocation5]
    $region53: #{tpu_custom_call.1} parent=1 // pred_fallthru
      _
    // Predicated region
    $region54: #{tpu_custom_call.1} parent=1 // pred_check
      _
    $region55: #{tpu_custom_call.1} parent=1 // pred_check_branch
      %258 = sbr.rel (0) target = $region57
    $region56: #{tpu_custom_call.1} parent=1 // pred_region
      %259 = dma.done [#allocation5], 32
    $region57: #{tpu_custom_call.1} parent=1 // pred_fallthru
      _
    %260 = vsyncpa [#allocation4], 1
    %261 = vsyncpa [#allocation7], 1
    %262 = vsyncpa [#allocation10], 1
    %263 = vsyncpa [#allocation5], 1

</llo_original>
